<compile_context>
chip_gen: v6e
topology: v6e:2x2x1
jax: 0.10.0
libtpu: 0.0.40
codegen_flags: <defaults>
</compile_context>

<pallas_src>
import functools

import numpy as np
import jax
import jax.numpy as jnp
from jax.experimental import pallas as pl
from jax.experimental.pallas import tpu as pltpu


def _made_kernel(num_hidden, n, k, *refs):
    """refs = x_ref, (wT_bf16, bias)*num_hidden, wT_head_bf16, bias_head, out_ref.

    out_ref is (TB, 3*n*k):
      columns [0, n*k)      : softmaxed pi, component-major (col = c*n + i)
      columns [n*k, 2*n*k)  : mu, dim-major (col = i*k + c)
      columns [2*n*k, 3*n*k): logstd, dim-major
    """
    pos = 0
    x_ref = refs[pos]; pos += 1

    h = x_ref[...]                                   # f32 activations (v5e-friendly VPU path)
    for _ in range(num_hidden):
        wt, b = refs[pos], refs[pos + 1]; pos += 2
        h = jnp.dot(h.astype(jnp.bfloat16), wt[...],
                    preferred_element_type=jnp.float32) + b[...]
        h = jnp.maximum(h, 0.0)                      # ReLU

    wt, b = refs[pos], refs[pos + 1]; pos += 2
    o = jnp.dot(h.astype(jnp.bfloat16), wt[...],
                preferred_element_type=jnp.float32) + b[...]   # (TB, 3*n*k)

    out_ref = refs[pos]
    nk = n * k

    # ---- grouped softmax on the pi block (component-major layout) ----
    slabs = [o[:, c * n:(c + 1) * n] for c in range(k)]   # each (TB, n): comp c of every dim
    gmax = slabs[0]
    for c in range(1, k):
        gmax = jnp.maximum(gmax, slabs[c])                 # per-group (per-dim) max
    es = [jnp.exp(s - gmax) for s in slabs]
    den = es[0]
    for c in range(1, k):
        den = den + es[c]
    inv = pl.reciprocal(den, approx=True)                  # EUP
    inv = inv * (2.0 - den * inv)                          # one Newton step -> ~exact divide

    pi = jnp.concatenate([e * inv for e in es], axis=-1)   # (TB, n*k), component-major
    out_ref[...] = jnp.concatenate([pi, o[:, nk:]], axis=-1)


def make_made_params(n, d, hidden_sizes, seed=0):
    """Deterministic replica of MADE.__init__ / create_masks parameter shapes."""
    assert d % 3 == 0, "output per dim must chunk into (pi, mu, logstd)"
    L = len(hidden_sizes) + 1
    output_dim = n * d
    layer_sizes = list(hidden_sizes) + [output_dim]

    # --- masks (deterministic replica of MADE.create_masks) ---
    rng = np.random.RandomState(seed)
    m = [rng.permutation(np.arange(n))]
    for l, h in zip(range(1, L), hidden_sizes):
        min_k = int(np.min(m[l - 1]))
        m.append(rng.choice(np.arange(min_k, n - 1), size=h))
    m.append(m[0])
    masks = [(m[l][:, None] >= m[l - 1][None, :]) for l in range(1, L)]
    masks.append(m[L][:, None] > m[L - 1][None, :])
    masks[-1] = np.repeat(masks[-1], d, axis=0)
    masks = [jnp.asarray(mm.astype(np.float32)) for mm in masks]

    # --- weights / biases: nn.Linear default init U(-1/sqrt(fan_in), 1/sqrt(fan_in)) ---
    key = jax.random.PRNGKey(seed)
    weights, biases = [], []
    prev = n
    for h in layer_sizes:
        key, kw, kb = jax.random.split(key, 3)
        bound = 1.0 / np.sqrt(prev)
        weights.append(jax.random.uniform(kw, (h, prev), jnp.float32, -bound, bound))
        biases.append(jax.random.uniform(kb, (h,), jnp.float32, -bound, bound))
        prev = h
    return weights, biases, masks


def made_forward_pallas(x, weights, biases, masks, n, d, *, batch_tile=128):
    B = x.shape[0]
    k = d // 3
    nk = n * k
    num_hidden = len(weights) - 1

    # ---- host-side prep: fold mask into weight, transpose, bf16-cast ----
    inputs = [x]
    for w, msk, b in zip(weights[:-1], masks[:-1], biases[:-1]):
        inputs += [(w * msk).T.astype(jnp.bfloat16), b.reshape(1, -1)]

    # Fused head: column permutation of the final masked linear.
    #   flat output index i*d + j  (dim i, channel j);  chunk(3): pi j<k, mu k<=j<2k, logstd 2k<=j.
    #   pi columns component-major (c*n + i), mu/logstd dim-major (i*k + c).
    idx = np.arange(n * d).reshape(n, d)
    rows_pi = idx[:, :k].T.reshape(-1)        # [c*n + i] -> i*d + c
    rows_mu = idx[:, k:2 * k].reshape(-1)     # [i*k + c] -> i*d + k + c
    rows_ls = idx[:, 2 * k:].reshape(-1)      # [i*k + c] -> i*d + 2k + c
    rows = np.concatenate([rows_pi, rows_mu, rows_ls])
    w_head = (weights[-1] * masks[-1])[rows].T.astype(jnp.bfloat16)   # (H_last, 3*n*k)
    b_head = biases[-1][rows].reshape(1, -1)
    inputs += [w_head, b_head]

    # ---- batch-tiled grid; weights resident via constant index_maps ----
    TB = min(batch_tile, B)
    assert B % TB == 0, "for simplicity batch must be divisible by the batch tile"
    grid = (B // TB,)

    in_specs = [pl.BlockSpec((TB, n), lambda i: (i, 0))]
    for a in inputs[1:]:
        in_specs.append(pl.BlockSpec(a.shape, lambda i: (0, 0)))
    out_spec = pl.BlockSpec((TB, 3 * nk), lambda i: (i, 0))

    out = pl.pallas_call(
        functools.partial(_made_kernel, num_hidden, n, k),
        out_shape=jax.ShapeDtypeStruct((B, 3 * nk), jnp.float32),
        grid_spec=pltpu.PrefetchScalarGridSpec(
            num_scalar_prefetch=0,
            grid=grid,
            in_specs=in_specs,
            out_specs=out_spec),
        compiler_params=pltpu.CompilerParams(
            dimension_semantics=("parallel",),
            vmem_limit_bytes=32 * 1024 * 1024),
    )(*inputs)

    pi = out[:, :nk].reshape(B, k, n).transpose(0, 2, 1)   # back to (B, n, k)
    mu = out[:, nk:2 * nk].reshape(B, n, k)
    logstd = out[:, 2 * nk:].reshape(B, n, k)
    return pi, mu, logstd


def made_forward_ref(x, weights, biases, masks, n, d):
    """Pure-JAX f32 reference matching the PyTorch forward exactly."""
    h = x
    for w, msk, b in zip(weights[:-1], masks[:-1], biases[:-1]):
        h = jax.nn.relu(h @ (w * msk).T + b)
    o = h @ (weights[-1] * masks[-1]).T + biases[-1]
    o = o.reshape(x.shape[0], n, d)
    k = d // 3
    pi = jax.nn.softmax(o[..., :k], axis=-1)
    return pi, o[..., k:2 * k], o[..., 2 * k:]


# TODO(synk): MADE.sample() (sequential multinomial/Normal sampling loop) is host-side
# autoregressive control flow, not part of forward(); not implemented as a kernel.

if __name__ == "__main__":
    n, d, hidden_sizes = 8, 6, [32, 32]   # d = 3 * (num mixture components k=2)
    B, TB = 256, 128                      # grid of 2 batch tiles exercises the pipeline

    weights, biases, masks = make_made_params(n, d, hidden_sizes, seed=0)
    x = jax.random.normal(jax.random.PRNGKey(0), (B, n), jnp.float32)

    pi, mu, logstd = made_forward_pallas(x, weights, biases, masks, n, d, batch_tile=TB)
    jax.block_until_ready((pi, mu, logstd))

    pi_r, mu_r, ls_r = made_forward_ref(x, weights, biases, masks, n, d)
    # bf16 weights vs f32 reference -> slightly loosened tolerances
    np.testing.assert_allclose(np.asarray(pi), np.asarray(pi_r), rtol=2e-2, atol=2e-2)
    np.testing.assert_allclose(np.asarray(mu), np.asarray(mu_r), rtol=2e-2, atol=2e-2)
    np.testing.assert_allclose(np.asarray(logstd), np.asarray(ls_r), rtol=2e-2, atol=2e-2)
    k = d // 3
    assert pi.shape == (B, n, k) and mu.shape == (B, n, k) and logstd.shape == (B, n, k)
    assert np.allclose(np.asarray(pi).sum(-1), 1.0, atol=1e-4)

    print("KERNEL_OK")
</pallas_src>

<mosaic_0001>
module attributes {stable_mosaic.version = 11 : i64} {
  func.func @_made_kernel(%arg0: i32, %arg1: memref<128x8xf32, #tpu.memory_space<vmem>>, %arg2: memref<8x32xbf16, #tpu.memory_space<vmem>>, %arg3: memref<1x32xf32, #tpu.memory_space<vmem>>, %arg4: memref<32x32xbf16, #tpu.memory_space<vmem>>, %arg5: memref<1x32xf32, #tpu.memory_space<vmem>>, %arg6: memref<32x48xbf16, #tpu.memory_space<vmem>>, %arg7: memref<1x48xf32, #tpu.memory_space<vmem>>, %arg8: memref<128x48xf32, #tpu.memory_space<vmem>>) attributes {dimension_semantics = [#tpu.dimension_semantics<parallel>], iteration_bounds = array<i64: 2>, scalar_prefetch = 0 : i64, scratch_operands = 0 : i64, tpu.core_type = #tpu.core_type<tc>, window_params = [{transform_indices = @transform_0, window_bounds = array<i64: 128, 8>}, {pipeline_mode = #tpu.pipeline_mode<synchronous>, transform_indices = @transform_1, window_bounds = array<i64: 8, 32>}, {pipeline_mode = #tpu.pipeline_mode<synchronous>, transform_indices = @transform_2, window_bounds = array<i64: 1, 32>}, {pipeline_mode = #tpu.pipeline_mode<synchronous>, transform_indices = @transform_3, window_bounds = array<i64: 32, 32>}, {pipeline_mode = #tpu.pipeline_mode<synchronous>, transform_indices = @transform_4, window_bounds = array<i64: 1, 32>}, {pipeline_mode = #tpu.pipeline_mode<synchronous>, transform_indices = @transform_5, window_bounds = array<i64: 32, 48>}, {pipeline_mode = #tpu.pipeline_mode<synchronous>, transform_indices = @transform_6, window_bounds = array<i64: 1, 48>}, {transform_indices = @transform_7, window_bounds = array<i64: 128, 48>}]} {
    %c0 = arith.constant 0 : index
    %c0_0 = arith.constant 0 : index
    %0 = vector.load %arg1[%c0, %c0_0] : memref<128x8xf32, #tpu.memory_space<vmem>>, vector<128x8xf32>
    %1 = arith.truncf %0 : vector<128x8xf32> to vector<128x8xbf16>
    %c0_1 = arith.constant 0 : index
    %c0_2 = arith.constant 0 : index
    %2 = vector.load %arg2[%c0_1, %c0_2] : memref<8x32xbf16, #tpu.memory_space<vmem>>, vector<8x32xbf16>
    %cst = arith.constant dense<0.000000e+00> : vector<128x32xf32>
    %3 = tpu.matmul %1, %2, %cst {dimension_numbers = #tpu.dot_dimension_numbers<[1], [0], [0], [1], [0, 0, 1, 1], [], []>} : vector<128x8xbf16>, vector<8x32xbf16>, vector<128x32xf32> -> vector<128x32xf32>
    %c0_3 = arith.constant 0 : index
    %c0_4 = arith.constant 0 : index
    %4 = vector.load %arg3[%c0_3, %c0_4] : memref<1x32xf32, #tpu.memory_space<vmem>>, vector<1x32xf32>
    %5 = vector.broadcast %4 : vector<1x32xf32> to vector<128x32xf32>
    %6 = arith.addf %3, %5 : vector<128x32xf32>
    %cst_5 = arith.constant 0.000000e+00 : f32
    %7 = vector.broadcast %cst_5 : f32 to vector<128x32xf32>
    %8 = arith.maximumf %6, %7 : vector<128x32xf32>
    %9 = arith.truncf %8 : vector<128x32xf32> to vector<128x32xbf16>
    %c0_6 = arith.constant 0 : index
    %c0_7 = arith.constant 0 : index
    %10 = vector.load %arg4[%c0_6, %c0_7] : memref<32x32xbf16, #tpu.memory_space<vmem>>, vector<32x32xbf16>
    %cst_8 = arith.constant dense<0.000000e+00> : vector<128x32xf32>
    %11 = tpu.matmul %9, %10, %cst_8 {dimension_numbers = #tpu.dot_dimension_numbers<[1], [0], [0], [1], [0, 0, 1, 1], [], []>} : vector<128x32xbf16>, vector<32x32xbf16>, vector<128x32xf32> -> vector<128x32xf32>
    %c0_9 = arith.constant 0 : index
    %c0_10 = arith.constant 0 : index
    %12 = vector.load %arg5[%c0_9, %c0_10] : memref<1x32xf32, #tpu.memory_space<vmem>>, vector<1x32xf32>
    %13 = vector.broadcast %12 : vector<1x32xf32> to vector<128x32xf32>
    %14 = arith.addf %11, %13 : vector<128x32xf32>
    %cst_11 = arith.constant 0.000000e+00 : f32
    %15 = vector.broadcast %cst_11 : f32 to vector<128x32xf32>
    %16 = arith.maximumf %14, %15 : vector<128x32xf32>
    %17 = arith.truncf %16 : vector<128x32xf32> to vector<128x32xbf16>
    %c0_12 = arith.constant 0 : index
    %c0_13 = arith.constant 0 : index
    %18 = vector.load %arg6[%c0_12, %c0_13] : memref<32x48xbf16, #tpu.memory_space<vmem>>, vector<32x48xbf16>
    %cst_14 = arith.constant dense<0.000000e+00> : vector<128x48xf32>
    %19 = tpu.matmul %17, %18, %cst_14 {dimension_numbers = #tpu.dot_dimension_numbers<[1], [0], [0], [1], [0, 0, 1, 1], [], []>} : vector<128x32xbf16>, vector<32x48xbf16>, vector<128x48xf32> -> vector<128x48xf32>
    %c0_15 = arith.constant 0 : index
    %c0_16 = arith.constant 0 : index
    %20 = vector.load %arg7[%c0_15, %c0_16] : memref<1x48xf32, #tpu.memory_space<vmem>>, vector<1x48xf32>
    %21 = vector.broadcast %20 : vector<1x48xf32> to vector<128x48xf32>
    %22 = arith.addf %19, %21 : vector<128x48xf32>
    %23 = vector.extract_strided_slice %22 {offsets = [0, 0], sizes = [128, 8], strides = [1, 1]} : vector<128x48xf32> to vector<128x8xf32>
    %24 = vector.extract_strided_slice %22 {offsets = [0, 8], sizes = [128, 8], strides = [1, 1]} : vector<128x48xf32> to vector<128x8xf32>
    %25 = arith.maximumf %23, %24 : vector<128x8xf32>
    %26 = arith.subf %23, %25 : vector<128x8xf32>
    %27 = math.exp %26 : vector<128x8xf32>
    %28 = arith.subf %24, %25 : vector<128x8xf32>
    %29 = math.exp %28 : vector<128x8xf32>
    %30 = arith.addf %27, %29 : vector<128x8xf32>
    %31 = tpu.reciprocal %30 {approx = true} : vector<128x8xf32> -> vector<128x8xf32>
    %32 = arith.mulf %30, %31 : vector<128x8xf32>
    %cst_17 = arith.constant 2.000000e+00 : f32
    %33 = vector.broadcast %cst_17 : f32 to vector<128x8xf32>
    %34 = arith.subf %33, %32 : vector<128x8xf32>
    %35 = arith.mulf %31, %34 : vector<128x8xf32>
    %36 = arith.mulf %27, %35 : vector<128x8xf32>
    %37 = arith.mulf %29, %35 : vector<128x8xf32>
    %38 = tpu.concatenate %36, %37 in 1 : vector<128x8xf32>, vector<128x8xf32> -> vector<128x16xf32>
    %39 = vector.extract_strided_slice %22 {offsets = [0, 16], sizes = [128, 32], strides = [1, 1]} : vector<128x48xf32> to vector<128x32xf32>
    %40 = tpu.concatenate %38, %39 in 1 : vector<128x16xf32>, vector<128x32xf32> -> vector<128x48xf32>
    %c0_18 = arith.constant 0 : index
    %c0_19 = arith.constant 0 : index
    %41 = vector.load %arg8[%c0_18, %c0_19] : memref<128x48xf32, #tpu.memory_space<vmem>>, vector<128x48xf32>
    tpu.vector_store %arg8[%c0_18, %c0_19], %40 {strides = array<i32>} : memref<128x48xf32, #tpu.memory_space<vmem>>, vector<128x48xf32>,
    return
  }
  func.func @transform_0(%arg0: i32) -> (i32, i32) {
    %c0_i32 = arith.constant 0 : i32
    %c0_i32_0 = arith.constant 0 : i32
    return %arg0, %c0_i32 : i32, i32
  }
  func.func @transform_1(%arg0: i32) -> (i32, i32) {
    %c0_i32 = arith.constant 0 : i32
    %c0_i32_0 = arith.constant 0 : i32
    %c0_i32_1 = arith.constant 0 : i32
    return %c0_i32, %c0_i32_0 : i32, i32
  }
  func.func @transform_2(%arg0: i32) -> (i32, i32) {
    %c0_i32 = arith.constant 0 : i32
    %c0_i32_0 = arith.constant 0 : i32
    %c0_i32_1 = arith.constant 0 : i32
    return %c0_i32, %c0_i32_0 : i32, i32
  }
  func.func @transform_3(%arg0: i32) -> (i32, i32) {
    %c0_i32 = arith.constant 0 : i32
    %c0_i32_0 = arith.constant 0 : i32
    %c0_i32_1 = arith.constant 0 : i32
    return %c0_i32, %c0_i32_0 : i32, i32
  }
  func.func @transform_4(%arg0: i32) -> (i32, i32) {
    %c0_i32 = arith.constant 0 : i32
    %c0_i32_0 = arith.constant 0 : i32
    %c0_i32_1 = arith.constant 0 : i32
    return %c0_i32, %c0_i32_0 : i32, i32
  }
  func.func @transform_5(%arg0: i32) -> (i32, i32) {
    %c0_i32 = arith.constant 0 : i32
    %c0_i32_0 = arith.constant 0 : i32
    %c0_i32_1 = arith.constant 0 : i32
    return %c0_i32, %c0_i32_0 : i32, i32
  }
  func.func @transform_6(%arg0: i32) -> (i32, i32) {
    %c0_i32 = arith.constant 0 : i32
    %c0_i32_0 = arith.constant 0 : i32
    %c0_i32_1 = arith.constant 0 : i32
    return %c0_i32, %c0_i32_0 : i32, i32
  }
  func.func @transform_7(%arg0: i32) -> (i32, i32) {
    %c0_i32 = arith.constant 0 : i32
    %c0_i32_0 = arith.constant 0 : i32
    return %arg0, %c0_i32 : i32, i32
  }
}

</mosaic_0001>

<llo_original>
// kernel: tpu_custom_call.1
$region0: #{tpu_custom_call.1}
  #allocation0 [shape = 'u32[]', space=smem, size = 0x4, offset = 0x4, fixed_abs, tag = 'smem constant byte address 0x4 - core index']
  #allocation1 [shape = 'u32[144,128]{1,0:T(1,128)}', space=vmem, size = 0x12000, scoped, tag = 'internal scratch']
  %s0 = inlined_call_operand.vmem [shape: f32[256,8], index: 0, kind: input, shape index: {}]
  %s1 = inlined_call_operand.vmem [shape: bf16[8,32], index: 1, kind: input, shape index: {}]
  %s2 = inlined_call_operand.vmem [shape: f32[1,32], index: 2, kind: input, shape index: {}]
  %s3 = inlined_call_operand.vmem [shape: bf16[32,32], index: 3, kind: input, shape index: {}]
  %s4 = inlined_call_operand.vmem [shape: f32[1,32], index: 4, kind: input, shape index: {}]
  %s5 = inlined_call_operand.vmem [shape: bf16[32,48], index: 5, kind: input, shape index: {}]
  %s6 = inlined_call_operand.vmem [shape: f32[1,48], index: 6, kind: input, shape index: {}]
  %s7 = inlined_call_operand.vmem [shape: f32[256,48], index: 7, kind: output, shape index: {}]
  %s8 = sld [smem:[#allocation0]]
  $region61: #{tpu_custom_call.1} parent=0
    _
  %s10 = ssub.s32 1, %s8
  %s11 = scalar_select 0, %s10, %s8
  loop: start=0, step=1, limit=4
  $region2: #{tpu_custom_call.1} parent=0 // loop_pre_header
    _
  $region3: #{tpu_custom_call.1} parent=0 // loop_header
    %s13 = sphi 0, %s17
    %p14 = scmp.ge.s32.totalorder %s13, 4
    %s23 = sphi 0, %s25
    %s26 = sphi 0, %s23
    %s27 = sphi 0, %s26
    %s43 = sphi 0, %s27
    %s47 = sphi 0, %s47
    %s49 = sphi 0, %s47
    %s50 = sphi 0, %s49
    %s64 = sphi 0, %s50
    %s68 = sphi 0, %s68
    %s70 = sphi 0, %s68
    %s71 = sphi 0, %s70
    %s85 = sphi 0, %s71
    %s89 = sphi 0, %s89
    %s91 = sphi 0, %s89
    %s92 = sphi 0, %s91
    %s106 = sphi 0, %s92
    %s110 = sphi 0, %s110
    %s112 = sphi 0, %s110
    %s113 = sphi 0, %s112
    %s127 = sphi 0, %s113
    %s131 = sphi 0, %s131
    %s133 = sphi 0, %s131
    %s134 = sphi 0, %s133
    %s148 = sphi 0, %s134
    %s152 = sphi 0, %s152
    %s154 = sphi 0, %s152
    %s155 = sphi 0, %s154
    %s169 = sphi 0, %s155
    %s175 = sphi 0, %s177
    %s178 = sphi 0, %s175
    %s179 = sphi 0, %s178
    %s195 = sphi 0, %s179
  $region4: #{tpu_custom_call.1} parent=0 // loop_header_branch
    %16 = sbr.rel (%p14) target = $region8
  $region5: #{tpu_custom_call.1} parent=0 // loop_body
    %s18 = ssub.s32 %s13, 1
    %s19 = ssub.s32 %s13, 2
    %s20 = sadd.s32 %s13, 1
    %s21 = ssub.s32 %s13, %s20
    %p22 = scmp.eq.s32.totalorder %s21, 0
    %s24 = sadd.s32 %s23, 1
    %s25 = scalar_select %p22, %s23, %s24
    %p28 = pneg %p22
    %p29 = scmp.eq.s32.totalorder %s13, 1
    %p30 = por %p28, %p29
    %p31 = scmp.ne.s32.totalorder %s23, %s26
    %p32 = scmp.eq.s32.totalorder %s13, 0
    %p33 = por %p31, %p32
    %p34 = scmp.ne.s32.totalorder %s23, %s26
    %p35 = scmp.eq.s32.totalorder %s18, 1
    %p36 = por %p34, %p35
    %p37 = scmp.ne.s32.totalorder %s26, %s27
    %p38 = scmp.eq.s32.totalorder %s18, 0
    %p39 = por %p37, %p38
    %p40 = scmp.ne.s32.totalorder %s26, %s27
    %p41 = scmp.eq.s32.totalorder %s19, 1
    %p42 = por %p40, %p41
    %p44 = scmp.ne.s32.totalorder %s27, %s43
    %p45 = scmp.eq.s32.totalorder %s19, 0
    %p46 = por %p44, %p45
    %s48 = sadd.s32 %s47, 1
    %p51 = scmp.eq.s32.totalorder %s13, 1
    %p52 = scmp.ne.s32.totalorder %s47, %s49
    %p53 = scmp.eq.s32.totalorder %s13, 0
    %p54 = por %p52, %p53
    %p55 = scmp.ne.s32.totalorder %s47, %s49
    %p56 = scmp.eq.s32.totalorder %s18, 1
    %p57 = por %p55, %p56
    %p58 = scmp.ne.s32.totalorder %s49, %s50
    %p59 = scmp.eq.s32.totalorder %s18, 0
    %p60 = por %p58, %p59
    %p61 = scmp.ne.s32.totalorder %s49, %s50
    %p62 = scmp.eq.s32.totalorder %s19, 1
    %p63 = por %p61, %p62
    %p65 = scmp.ne.s32.totalorder %s50, %s64
    %p66 = scmp.eq.s32.totalorder %s19, 0
    %p67 = por %p65, %p66
    %s69 = sadd.s32 %s68, 1
    %p72 = scmp.eq.s32.totalorder %s13, 1
    %p73 = scmp.ne.s32.totalorder %s68, %s70
    %p74 = scmp.eq.s32.totalorder %s13, 0
    %p75 = por %p73, %p74
    %p76 = scmp.ne.s32.totalorder %s68, %s70
    %p77 = scmp.eq.s32.totalorder %s18, 1
    %p78 = por %p76, %p77
    %p79 = scmp.ne.s32.totalorder %s70, %s71
    %p80 = scmp.eq.s32.totalorder %s18, 0
    %p81 = por %p79, %p80
    %p82 = scmp.ne.s32.totalorder %s70, %s71
    %p83 = scmp.eq.s32.totalorder %s19, 1
    %p84 = por %p82, %p83
    %p86 = scmp.ne.s32.totalorder %s71, %s85
    %p87 = scmp.eq.s32.totalorder %s19, 0
    %p88 = por %p86, %p87
    %s90 = sadd.s32 %s89, 1
    %p93 = scmp.eq.s32.totalorder %s13, 1
    %p94 = scmp.ne.s32.totalorder %s89, %s91
    %p95 = scmp.eq.s32.totalorder %s13, 0
    %p96 = por %p94, %p95
    %p97 = scmp.ne.s32.totalorder %s89, %s91
    %p98 = scmp.eq.s32.totalorder %s18, 1
    %p99 = por %p97, %p98
    %p100 = scmp.ne.s32.totalorder %s91, %s92
    %p101 = scmp.eq.s32.totalorder %s18, 0
    %p102 = por %p100, %p101
    %p103 = scmp.ne.s32.totalorder %s91, %s92
    %p104 = scmp.eq.s32.totalorder %s19, 1
    %p105 = por %p103, %p104
    %p107 = scmp.ne.s32.totalorder %s92, %s106
    %p108 = scmp.eq.s32.totalorder %s19, 0
    %p109 = por %p107, %p108
    %s111 = sadd.s32 %s110, 1
    %p114 = scmp.eq.s32.totalorder %s13, 1
    %p115 = scmp.ne.s32.totalorder %s110, %s112
    %p116 = scmp.eq.s32.totalorder %s13, 0
    %p117 = por %p115, %p116
    %p118 = scmp.ne.s32.totalorder %s110, %s112
    %p119 = scmp.eq.s32.totalorder %s18, 1
    %p120 = por %p118, %p119
    %p121 = scmp.ne.s32.totalorder %s112, %s113
    %p122 = scmp.eq.s32.totalorder %s18, 0
    %p123 = por %p121, %p122
    %p124 = scmp.ne.s32.totalorder %s112, %s113
    %p125 = scmp.eq.s32.totalorder %s19, 1
    %p126 = por %p124, %p125
    %p128 = scmp.ne.s32.totalorder %s113, %s127
    %p129 = scmp.eq.s32.totalorder %s19, 0
    %p130 = por %p128, %p129
    %s132 = sadd.s32 %s131, 1
    %p135 = scmp.eq.s32.totalorder %s13, 1
    %p136 = scmp.ne.s32.totalorder %s131, %s133
    %p137 = scmp.eq.s32.totalorder %s13, 0
    %p138 = por %p136, %p137
    %p139 = scmp.ne.s32.totalorder %s131, %s133
    %p140 = scmp.eq.s32.totalorder %s18, 1
    %p141 = por %p139, %p140
    %p142 = scmp.ne.s32.totalorder %s133, %s134
    %p143 = scmp.eq.s32.totalorder %s18, 0
    %p144 = por %p142, %p143
    %p145 = scmp.ne.s32.totalorder %s133, %s134
    %p146 = scmp.eq.s32.totalorder %s19, 1
    %p147 = por %p145, %p146
    %p149 = scmp.ne.s32.totalorder %s134, %s148
    %p150 = scmp.eq.s32.totalorder %s19, 0
    %p151 = por %p149, %p150
    %s153 = sadd.s32 %s152, 1
    %p156 = scmp.eq.s32.totalorder %s13, 1
    %p157 = scmp.ne.s32.totalorder %s152, %s154
    %p158 = scmp.eq.s32.totalorder %s13, 0
    %p159 = por %p157, %p158
    %p160 = scmp.ne.s32.totalorder %s152, %s154
    %p161 = scmp.eq.s32.totalorder %s18, 1
    %p162 = por %p160, %p161
    %p163 = scmp.ne.s32.totalorder %s154, %s155
    %p164 = scmp.eq.s32.totalorder %s18, 0
    %p165 = por %p163, %p164
    %p166 = scmp.ne.s32.totalorder %s154, %s155
    %p167 = scmp.eq.s32.totalorder %s19, 1
    %p168 = por %p166, %p167
    %p170 = scmp.ne.s32.totalorder %s155, %s169
    %p171 = scmp.eq.s32.totalorder %s19, 0
    %p172 = por %p170, %p171
    %s173 = ssub.s32 %s13, %s20
    %p174 = scmp.eq.s32.totalorder %s173, 0
    %s176 = sadd.s32 %s175, 1
    %s177 = scalar_select %p174, %s175, %s176
    %p180 = pneg %p174
    %p181 = scmp.eq.s32.totalorder %s13, 1
    %p182 = por %p180, %p181
    %p183 = scmp.ne.s32.totalorder %s175, %s178
    %p184 = scmp.eq.s32.totalorder %s13, 0
    %p185 = por %p183, %p184
    %p186 = scmp.ne.s32.totalorder %s175, %s178
    %p187 = scmp.eq.s32.totalorder %s18, 1
    %p188 = por %p186, %p187
    %p189 = scmp.ne.s32.totalorder %s178, %s179
    %p190 = scmp.eq.s32.totalorder %s18, 0
    %p191 = por %p189, %p190
    %p192 = scmp.ne.s32.totalorder %s178, %s179
    %p193 = scmp.eq.s32.totalorder %s19, 1
    %p194 = por %p192, %p193
    %p196 = scmp.ne.s32.totalorder %s179, %s195
    %p197 = scmp.eq.s32.totalorder %s19, 0
    %p198 = por %p196, %p197
    %p199 = scmp.le.s32.totalorder 1, %s13
    %p200 = scmp.lt.s32.totalorder %s13, 3
    %p201 = pnand %p199, %p200
    %p202 = pneg %p201
    // Predicated region
    $region9: #{tpu_custom_call.1} parent=5 // pred_check
      _
    $region10: #{tpu_custom_call.1} parent=5 // pred_check_branch
      %204 = sbr.rel (%p201) target = $region12
    $region11: #{tpu_custom_call.1} parent=5 // pred_region
      %s205 = ssub.s32 %s13, 1
      // Predicated region
      $region13: #{tpu_custom_call.1} parent=11 // pred_check
        %p206 = pneg %p60
      $region14: #{tpu_custom_call.1} parent=11 // pred_check_branch
        %208 = sbr.rel (%p206) target = $region16
      $region15: #{tpu_custom_call.1} parent=11 // pred_region
        _
      $region16: #{tpu_custom_call.1} parent=11 // pred_fallthru
        _
      // Predicated region
      $region17: #{tpu_custom_call.1} parent=11 // pred_check
        %p209 = pneg %p81
      $region18: #{tpu_custom_call.1} parent=11 // pred_check_branch
        %211 = sbr.rel (%p209) target = $region20
      $region19: #{tpu_custom_call.1} parent=11 // pred_region
        _
      $region20: #{tpu_custom_call.1} parent=11 // pred_fallthru
        _
      // Predicated region
      $region21: #{tpu_custom_call.1} parent=11 // pred_check
        %p212 = pneg %p102
      $region22: #{tpu_custom_call.1} parent=11 // pred_check_branch
        %214 = sbr.rel (%p212) target = $region24
      $region23: #{tpu_custom_call.1} parent=11 // pred_region
        _
      $region24: #{tpu_custom_call.1} parent=11 // pred_fallthru
        _
      // Predicated region
      $region25: #{tpu_custom_call.1} parent=11 // pred_check
        %p215 = pneg %p123
      $region26: #{tpu_custom_call.1} parent=11 // pred_check_branch
        %217 = sbr.rel (%p215) target = $region28
      $region27: #{tpu_custom_call.1} parent=11 // pred_region
        _
      $region28: #{tpu_custom_call.1} parent=11 // pred_fallthru
        _
      // Predicated region
      $region29: #{tpu_custom_call.1} parent=11 // pred_check
        %p218 = pneg %p144
      $region30: #{tpu_custom_call.1} parent=11 // pred_check_branch
        %220 = sbr.rel (%p218) target = $region32
      $region31: #{tpu_custom_call.1} parent=11 // pred_region
        _
      $region32: #{tpu_custom_call.1} parent=11 // pred_fallthru
        _
      // Predicated region
      $region33: #{tpu_custom_call.1} parent=11 // pred_check
        %p221 = pneg %p165
      $region34: #{tpu_custom_call.1} parent=11 // pred_check_branch
        %223 = sbr.rel (%p221) target = $region36
      $region35: #{tpu_custom_call.1} parent=11 // pred_region
        _
      $region36: #{tpu_custom_call.1} parent=11 // pred_fallthru
        _
    $region12: #{tpu_custom_call.1} parent=5 // pred_fallthru
      _
    %p224 = scmp.lt.s32.totalorder %s13, 2
    // Predicated region
    $region37: #{tpu_custom_call.1} parent=5 // pred_check
      %p225 = pneg %p224
    $region38: #{tpu_custom_call.1} parent=5 // pred_check_branch
      %227 = sbr.rel (%p225) target = $region40
    $region39: #{tpu_custom_call.1} parent=5 // pred_region
      // Predicated region
      $region41: #{tpu_custom_call.1} parent=39 // pred_check
        %p228 = pneg %p33
      $region42: #{tpu_custom_call.1} parent=39 // pred_check_branch
        %230 = sbr.rel (%p228) target = $region44
      $region43: #{tpu_custom_call.1} parent=39 // pred_region
        %s231 = smul.u32 16, %s13
        %p232 = scmp.lt.s32.totalorder %s231, 31
        %s233 = scalar_select %p232, %s231, 31
        %s234 = smul.addr %s233, 8
        %s235 = scalar_lea.vmem %s0, %s234
        %s236 = smul.u32 16, %s13
      $region44: #{tpu_custom_call.1} parent=39 // pred_fallthru
        _
    $region40: #{tpu_custom_call.1} parent=5 // pred_fallthru
      _
    %p237 = scmp.le.s32.totalorder 1, %s13
    %p238 = scmp.lt.s32.totalorder %s13, 3
    %p239 = pnand %p237, %p238
    %p240 = pneg %p239
    // Predicated region
    $region45: #{tpu_custom_call.1} parent=5 // pred_check
      _
    $region46: #{tpu_custom_call.1} parent=5 // pred_check_branch
      %242 = sbr.rel (%p239) target = $region48
    $region47: #{tpu_custom_call.1} parent=5 // pred_region
      %s243 = ssub.s32 %s13, 1
      %s244 = smul.u32 16, %s18
      %p245 = scmp.lt.s32.totalorder %s244, 31
      %s246 = scalar_select %p245, %s244, 31
      %s247 = smul.addr %s246, 8
      %s248 = scalar_lea.vmem %s0, %s247
      %p249 = pneg %p39
      %p250 = pneg %p36
      %p251 = pneg %p60
      %p252 = pneg %p57
      %p253 = pneg %p81
      %p254 = pneg %p78
      %p255 = pneg %p102
      %p256 = pneg %p99
      %p257 = pneg %p123
      %p258 = pneg %p120
      %p259 = pneg %p144
      %p260 = pneg %p141
      %p261 = pneg %p165
      %p262 = pneg %p162
      %p263 = pneg %p191
      %p264 = pneg %p188
      %s265 = smul.u32 16, %s18
      %p266 = scmp.lt.s32.totalorder %s265, 31
      %s267 = scalar_select %p266, %s265, 31
      %s268 = smul.addr %s267, 8
      %s269 = scalar_lea.vmem %s7, %s268
      %s270 = smul.u32 16, %s18
      %p271 = scmp.lt.s32.totalorder %s270, 31
      %s272 = scalar_select %p271, %s270, 31
      %s273 = smul.addr %s272, 8
      %s274 = scalar_lea.vmem %s0, %s273
      %s275 = smul.u32 16, %s18
      %s276 = smul.u32 16, %s18
      %p277 = scmp.lt.s32.totalorder %s276, 31
      %s278 = scalar_select %p277, %s276, 31
      %s279 = smul.addr %s278, 8
      %s280 = scalar_lea.vmem %s7, %s279
      %s281 = smul.u32 16, %s18
      %v283 = vld [vmem:[%s274] sm:$0xff]
      %v284 = vld [vmem:[%s274 + $0x8] sm:$0xff]
      %v285 = vld [vmem:[%s274 + $0x10] sm:$0xff]
      %v286 = vld [vmem:[%s274 + $0x18] sm:$0xff]
      %v287 = vld [vmem:[%s274 + $0x20] sm:$0xff]
      %v288 = vld [vmem:[%s274 + $0x28] sm:$0xff]
      %v289 = vld [vmem:[%s274 + $0x30] sm:$0xff]
      %v290 = vld [vmem:[%s274 + $0x38] sm:$0xff]
      %v291 = vld [vmem:[%s274 + $0x40] sm:$0xff]
      %v292 = vld [vmem:[%s274 + $0x48] sm:$0xff]
      %v293 = vld [vmem:[%s274 + $0x50] sm:$0xff]
      %v294 = vld [vmem:[%s274 + $0x58] sm:$0xff]
      %v295 = vld [vmem:[%s274 + $0x60] sm:$0xff]
      %v296 = vld [vmem:[%s274 + $0x68] sm:$0xff]
      %v297 = vld [vmem:[%s274 + $0x70] sm:$0xff]
      %v298 = vld [vmem:[%s274 + $0x78] sm:$0xff]
      %v299 = vpack.c.bf16 %v284, %v283
      %v300 = vpack.c.bf16 %v286, %v285
      %v301 = vpack.c.bf16 %v288, %v287
      %v302 = vpack.c.bf16 %v290, %v289
      %v303 = vpack.c.bf16 %v292, %v291
      %v304 = vpack.c.bf16 %v294, %v293
      %v305 = vpack.c.bf16 %v296, %v295
      %v306 = vpack.c.bf16 %v298, %v297
      %v307 = vld [vmem:[%s1] sm:$0xf]
      %v308 = vld [vmem:[%s2] sm:$0x1]
      %v310 = vlaneseq
      %v311 = vshrl.u32 %v310, 7
      %v312 = vsub.s32 0, %v311
      %v313 = vrot.slane %v308, %v312
      %vm315 = vcmask 64512
      %v317 = vsel %vm315, %v299, 0
      %v320 = vsel %vm315, %v300, 0
      %v323 = vsel %vm315, %v301, 0
      %v326 = vsel %vm315, %v302, 0
      %v329 = vsel %vm315, %v303, 0
      %v332 = vsel %vm315, %v304, 0
      %v335 = vsel %vm315, %v305, 0
      %v338 = vsel %vm315, %v306, 0
      %vm340 = vcmask 1043456
      %v342 = vsel %vm340, %v307, 0
      %344 = vmatprep.subr.bf16.mxu0 0
      %345 = vmatpush1.bf16.msra.mxu0 0
      %346 = vmatprep.subr.bf16.mxu0 0
      %347 = vmatpush1.bf16.msra.mxu0 0
      %348 = vmatprep.subr.bf16.mxu0 0
      %349 = vmatpush1.bf16.msra.mxu0 0
      %350 = vmatprep.subr.bf16.mxu0 0
      %351 = vmatpush1.bf16.msra.mxu0 0
      %352 = vmatprep.subr.bf16.mxu0 0
      %353 = vmatpush1.bf16.msra.mxu0 0
      %354 = vmatprep.subr.bf16.mxu0 0
      %355 = vmatpush1.bf16.msra.mxu0 0
      %356 = vmatprep.subr.bf16.mxu0 0
      %357 = vmatpush1.bf16.msra.mxu0 0
      %358 = vmatprep.subr.bf16.mxu0 0
      %359 = vmatpush1.bf16.msra.mxu0 %v342
      %360 = vmatprep.subr.bf16.mxu0 0
      %361 = vmatpush2.bf16.msra.mxu0 0
      %362 = vmatprep.subr.bf16.mxu0 0
      %363 = vmatpush2.bf16.msra.mxu0 0
      %364 = vmatprep.subr.bf16.mxu0 0
      %365 = vmatpush2.bf16.msra.mxu0 0
      %366 = vmatprep.subr.bf16.mxu0 0
      %367 = vmatpush2.bf16.msra.mxu0 0
      %368 = vmatprep.subr.bf16.mxu0 0
      %369 = vmatpush2.bf16.msra.mxu0 0
      %370 = vmatprep.subr.bf16.mxu0 0
      %371 = vmatpush2.bf16.msra.mxu0 0
      %372 = vmatprep.subr.bf16.mxu0 0
      %373 = vmatpush2.bf16.msra.mxu0 0
      %374 = vmatprep.subr.bf16.mxu0 0
      %375 = vmatpush2.bf16.msra.mxu0 0
      %376 = vmatprep.mubr.bf16.mxu0 0
      %377 = vmatmul.mubr.bf16.gmra.mxu0 %v317
      %v378 = vpop.f32.mrf.mxu0
      %v379 = vadd.f32 %v313, %v378
      %v380 = vpop.f32.mrf.mxu0
      %v381 = vpop.f32.mrf.mxu0
      %v382 = vadd.f32 %v313, %v381
      %v383 = vpop.f32.mrf.mxu0
      %384 = vmatprep.mubr.bf16.mxu0 0
      %385 = vmatmul.mubr.bf16.gmra.mxu0 %v320
      %v386 = vpop.f32.mrf.mxu0
      %v387 = vadd.f32 %v313, %v386
      %v388 = vpop.f32.mrf.mxu0
      %v389 = vpop.f32.mrf.mxu0
      %v390 = vadd.f32 %v313, %v389
      %v391 = vpop.f32.mrf.mxu0
      %392 = vmatprep.mubr.bf16.mxu0 0
      %393 = vmatmul.mubr.bf16.gmra.mxu0 %v323
      %v394 = vpop.f32.mrf.mxu0
      %v395 = vadd.f32 %v313, %v394
      %v396 = vpop.f32.mrf.mxu0
      %v397 = vpop.f32.mrf.mxu0
      %v398 = vadd.f32 %v313, %v397
      %v399 = vpop.f32.mrf.mxu0
      %400 = vmatprep.mubr.bf16.mxu0 0
      %401 = vmatmul.mubr.bf16.gmra.mxu0 %v326
      %v402 = vpop.f32.mrf.mxu0
      %v403 = vadd.f32 %v313, %v402
      %v404 = vpop.f32.mrf.mxu0
      %v405 = vpop.f32.mrf.mxu0
      %v406 = vadd.f32 %v313, %v405
      %v407 = vpop.f32.mrf.mxu0
      %408 = vmatprep.mubr.bf16.mxu0 0
      %409 = vmatmul.mubr.bf16.gmra.mxu0 %v329
      %v410 = vpop.f32.mrf.mxu0
      %v411 = vadd.f32 %v313, %v410
      %v412 = vpop.f32.mrf.mxu0
      %v413 = vpop.f32.mrf.mxu0
      %v414 = vadd.f32 %v313, %v413
      %v415 = vpop.f32.mrf.mxu0
      %416 = vmatprep.mubr.bf16.mxu0 0
      %417 = vmatmul.mubr.bf16.gmra.mxu0 %v332
      %v418 = vpop.f32.mrf.mxu0
      %v419 = vadd.f32 %v313, %v418
      %v420 = vpop.f32.mrf.mxu0
      %v421 = vpop.f32.mrf.mxu0
      %v422 = vadd.f32 %v313, %v421
      %v423 = vpop.f32.mrf.mxu0
      %424 = vmatprep.mubr.bf16.mxu0 0
      %425 = vmatmul.mubr.bf16.gmra.mxu0 %v335
      %v426 = vpop.f32.mrf.mxu0
      %v427 = vadd.f32 %v313, %v426
      %v428 = vpop.f32.mrf.mxu0
      %v429 = vpop.f32.mrf.mxu0
      %v430 = vadd.f32 %v313, %v429
      %v431 = vpop.f32.mrf.mxu0
      %432 = vmatprep.mubr.bf16.mxu0 0
      %433 = vmatmul.mubr.bf16.gmra.mxu0 %v338
      %v434 = vpop.f32.mrf.mxu0
      %v435 = vadd.f32 %v313, %v434
      %v436 = vpop.f32.mrf.mxu0
      %v437 = vpop.f32.mrf.mxu0
      %v438 = vadd.f32 %v313, %v437
      %v439 = vpop.f32.mrf.mxu0
      %440 = vdwg.mxu0
      %v441 = vmax.f32 %v379, 0.0
      %v442 = vmax.f32 %v382, 0.0
      %v443 = vmax.f32 %v387, 0.0
      %v444 = vmax.f32 %v390, 0.0
      %v445 = vmax.f32 %v395, 0.0
      %v446 = vmax.f32 %v398, 0.0
      %v447 = vmax.f32 %v403, 0.0
      %v448 = vmax.f32 %v406, 0.0
      %v449 = vmax.f32 %v411, 0.0
      %v450 = vmax.f32 %v414, 0.0
      %v451 = vmax.f32 %v419, 0.0
      %v452 = vmax.f32 %v422, 0.0
      %v453 = vmax.f32 %v427, 0.0
      %v454 = vmax.f32 %v430, 0.0
      %v455 = vmax.f32 %v435, 0.0
      %v456 = vmax.f32 %v438, 0.0
      %v457 = vpack.c.bf16 %v442, %v441
      %v458 = vpack.c.bf16 %v444, %v443
      %v459 = vpack.c.bf16 %v446, %v445
      %v460 = vpack.c.bf16 %v448, %v447
      %v461 = vpack.c.bf16 %v450, %v449
      %v462 = vpack.c.bf16 %v452, %v451
      %v463 = vpack.c.bf16 %v454, %v453
      %v464 = vpack.c.bf16 %v456, %v455
      %v465 = vld [vmem:[%s3] sm:$0xf]
      %v466 = vld [vmem:[%s3 + $0x4] sm:$0xf]
      %v467 = vld [vmem:[%s3 + $0x8] sm:$0xf]
      %v468 = vld [vmem:[%s3 + $0xc] sm:$0xf]
      %v469 = vld [vmem:[%s4] sm:$0x1]
      %v471 = vlaneseq
      %v472 = vshrl.u32 %v471, 7
      %v473 = vsub.s32 0, %v472
      %v474 = vrot.slane %v469, %v473
      %v480 = vunpack.c.l.b16 %v465
      %v481 = vunpack.c.l.b16 %v466
      %v482 = vunpack.c.l.b16 %v467
      %v483 = vunpack.c.l.b16 %v468
      %v484 = vpack.c.b16 %v481, %v480
      %v485 = vpack.c.b16 %v483, %v482
      %vm488 = vcmask 261120
      %v490 = vsel %vm488, %v457, 0
      %v493 = vsel %vm488, %v458, 0
      %v496 = vsel %vm488, %v459, 0
      %v499 = vsel %vm488, %v460, 0
      %v502 = vsel %vm488, %v461, 0
      %v505 = vsel %vm488, %v462, 0
      %v508 = vsel %vm488, %v463, 0
      %v511 = vsel %vm488, %v464, 0
      %513 = vmatprep.subr.bf16.mxu0 0
      %514 = vmatpush1.bf16.msra.mxu0 0
      %515 = vmatprep.subr.bf16.mxu0 0
      %516 = vmatpush1.bf16.msra.mxu0 0
      %517 = vmatprep.subr.bf16.mxu0 0
      %518 = vmatpush1.bf16.msra.mxu0 0
      %519 = vmatprep.subr.bf16.mxu0 0
      %520 = vmatpush1.bf16.msra.mxu0 0
      %521 = vmatprep.subr.bf16.mxu0 0
      %522 = vmatpush1.bf16.msra.mxu0 0
      %523 = vmatprep.subr.bf16.mxu0 0
      %524 = vmatpush1.bf16.msra.mxu0 0
      %525 = vmatprep.subr.bf16.mxu0 0
      %526 = vmatpush1.bf16.msra.mxu0 %v485
      %527 = vmatprep.subr.bf16.mxu0 0
      %528 = vmatpush1.bf16.msra.mxu0 %v484
      %529 = vmatprep.subr.bf16.mxu0 0
      %530 = vmatpush2.bf16.msra.mxu0 0
      %531 = vmatprep.subr.bf16.mxu0 0
      %532 = vmatpush2.bf16.msra.mxu0 0
      %533 = vmatprep.subr.bf16.mxu0 0
      %534 = vmatpush2.bf16.msra.mxu0 0
      %535 = vmatprep.subr.bf16.mxu0 0
      %536 = vmatpush2.bf16.msra.mxu0 0
      %537 = vmatprep.subr.bf16.mxu0 0
      %538 = vmatpush2.bf16.msra.mxu0 0
      %539 = vmatprep.subr.bf16.mxu0 0
      %540 = vmatpush2.bf16.msra.mxu0 0
      %541 = vmatprep.subr.bf16.mxu0 0
      %542 = vmatpush2.bf16.msra.mxu0 0
      %543 = vmatprep.subr.bf16.mxu0 0
      %544 = vmatpush2.bf16.msra.mxu0 0
      %545 = vmatprep.mubr.bf16.mxu0 0
      %546 = vmatmul.mubr.bf16.gmra.mxu0 %v490
      %v547 = vpop.f32.mrf.mxu0
      %v548 = vadd.f32 %v474, %v547
      %v549 = vpop.f32.mrf.mxu0
      %v550 = vpop.f32.mrf.mxu0
      %v551 = vadd.f32 %v474, %v550
      %v552 = vpop.f32.mrf.mxu0
      %553 = vmatprep.mubr.bf16.mxu0 0
      %554 = vmatmul.mubr.bf16.gmra.mxu0 %v493
      %v555 = vpop.f32.mrf.mxu0
      %v556 = vadd.f32 %v474, %v555
      %v557 = vpop.f32.mrf.mxu0
      %v558 = vpop.f32.mrf.mxu0
      %v559 = vadd.f32 %v474, %v558
      %v560 = vpop.f32.mrf.mxu0
      %561 = vmatprep.mubr.bf16.mxu0 0
      %562 = vmatmul.mubr.bf16.gmra.mxu0 %v496
      %v563 = vpop.f32.mrf.mxu0
      %v564 = vadd.f32 %v474, %v563
      %v565 = vpop.f32.mrf.mxu0
      %v566 = vpop.f32.mrf.mxu0
      %v567 = vadd.f32 %v474, %v566
      %v568 = vpop.f32.mrf.mxu0
      %569 = vmatprep.mubr.bf16.mxu0 0
      %570 = vmatmul.mubr.bf16.gmra.mxu0 %v499
      %v571 = vpop.f32.mrf.mxu0
      %v572 = vadd.f32 %v474, %v571
      %v573 = vpop.f32.mrf.mxu0
      %v574 = vpop.f32.mrf.mxu0
      %v575 = vadd.f32 %v474, %v574
      %v576 = vpop.f32.mrf.mxu0
      %577 = vmatprep.mubr.bf16.mxu0 0
      %578 = vmatmul.mubr.bf16.gmra.mxu0 %v502
      %v579 = vpop.f32.mrf.mxu0
      %v580 = vadd.f32 %v474, %v579
      %v581 = vpop.f32.mrf.mxu0
      %v582 = vpop.f32.mrf.mxu0
      %v583 = vadd.f32 %v474, %v582
      %v584 = vpop.f32.mrf.mxu0
      %585 = vmatprep.mubr.bf16.mxu0 0
      %586 = vmatmul.mubr.bf16.gmra.mxu0 %v505
      %v587 = vpop.f32.mrf.mxu0
      %v588 = vadd.f32 %v474, %v587
      %v589 = vpop.f32.mrf.mxu0
      %v590 = vpop.f32.mrf.mxu0
      %v591 = vadd.f32 %v474, %v590
      %v592 = vpop.f32.mrf.mxu0
      %593 = vmatprep.mubr.bf16.mxu0 0
      %594 = vmatmul.mubr.bf16.gmra.mxu0 %v508
      %v595 = vpop.f32.mrf.mxu0
      %v596 = vadd.f32 %v474, %v595
      %v597 = vpop.f32.mrf.mxu0
      %v598 = vpop.f32.mrf.mxu0
      %v599 = vadd.f32 %v474, %v598
      %v600 = vpop.f32.mrf.mxu0
      %601 = vmatprep.mubr.bf16.mxu0 0
      %602 = vmatmul.mubr.bf16.gmra.mxu0 %v511
      %v603 = vpop.f32.mrf.mxu0
      %v604 = vadd.f32 %v474, %v603
      %v605 = vpop.f32.mrf.mxu0
      %v606 = vpop.f32.mrf.mxu0
      %v607 = vadd.f32 %v474, %v606
      %v608 = vpop.f32.mrf.mxu0
      %609 = vdwg.mxu0
      %v610 = vmax.f32 %v548, 0.0
      %v611 = vmax.f32 %v551, 0.0
      %v612 = vmax.f32 %v556, 0.0
      %v613 = vmax.f32 %v559, 0.0
      %v614 = vmax.f32 %v564, 0.0
      %v615 = vmax.f32 %v567, 0.0
      %v616 = vmax.f32 %v572, 0.0
      %v617 = vmax.f32 %v575, 0.0
      %v618 = vmax.f32 %v580, 0.0
      %v619 = vmax.f32 %v583, 0.0
      %v620 = vmax.f32 %v588, 0.0
      %v621 = vmax.f32 %v591, 0.0
      %v622 = vmax.f32 %v596, 0.0
      %v623 = vmax.f32 %v599, 0.0
      %v624 = vmax.f32 %v604, 0.0
      %v625 = vmax.f32 %v607, 0.0
      %v626 = vpack.c.bf16 %v611, %v610
      %v627 = vpack.c.bf16 %v613, %v612
      %v628 = vpack.c.bf16 %v615, %v614
      %v629 = vpack.c.bf16 %v617, %v616
      %v630 = vpack.c.bf16 %v619, %v618
      %v631 = vpack.c.bf16 %v621, %v620
      %v632 = vpack.c.bf16 %v623, %v622
      %v633 = vpack.c.bf16 %v625, %v624
      %v634 = vld [vmem:[%s5] sm:$0xf]
      %v635 = vld [vmem:[%s5 + $0x4] sm:$0xf]
      %v636 = vld [vmem:[%s5 + $0x8] sm:$0xf]
      %v637 = vld [vmem:[%s5 + $0xc] sm:$0xf]
      %v638 = vld [vmem:[%s6] sm:$0x1]
      %v640 = vlaneseq
      %v641 = vshrl.u32 %v640, 7
      %v642 = vsub.s32 0, %v641
      %v643 = vrot.slane %v638, %v642
      %v649 = vunpack.c.l.b16 %v634
      %v650 = vunpack.c.l.b16 %v635
      %v651 = vunpack.c.l.b16 %v636
      %v652 = vunpack.c.l.b16 %v637
      %v653 = vpack.c.b16 %v650, %v649
      %v654 = vpack.c.b16 %v652, %v651
      %v658 = vsel %vm488, %v626, 0
      %v661 = vsel %vm488, %v627, 0
      %v664 = vsel %vm488, %v628, 0
      %v667 = vsel %vm488, %v629, 0
      %v670 = vsel %vm488, %v630, 0
      %v673 = vsel %vm488, %v631, 0
      %v676 = vsel %vm488, %v632, 0
      %v679 = vsel %vm488, %v633, 0
      %681 = vmatprep.subr.bf16.mxu0 0
      %682 = vmatpush1.bf16.msra.mxu0 0
      %683 = vmatprep.subr.bf16.mxu0 0
      %684 = vmatpush1.bf16.msra.mxu0 0
      %685 = vmatprep.subr.bf16.mxu0 0
      %686 = vmatpush1.bf16.msra.mxu0 0
      %687 = vmatprep.subr.bf16.mxu0 0
      %688 = vmatpush1.bf16.msra.mxu0 0
      %689 = vmatprep.subr.bf16.mxu0 0
      %690 = vmatpush1.bf16.msra.mxu0 0
      %691 = vmatprep.subr.bf16.mxu0 0
      %692 = vmatpush1.bf16.msra.mxu0 0
      %693 = vmatprep.subr.bf16.mxu0 0
      %694 = vmatpush1.bf16.msra.mxu0 %v654
      %695 = vmatprep.subr.bf16.mxu0 0
      %696 = vmatpush1.bf16.msra.mxu0 %v653
      %697 = vmatprep.subr.bf16.mxu0 0
      %698 = vmatpush2.bf16.msra.mxu0 0
      %699 = vmatprep.subr.bf16.mxu0 0
      %700 = vmatpush2.bf16.msra.mxu0 0
      %701 = vmatprep.subr.bf16.mxu0 0
      %702 = vmatpush2.bf16.msra.mxu0 0
      %703 = vmatprep.subr.bf16.mxu0 0
      %704 = vmatpush2.bf16.msra.mxu0 0
      %705 = vmatprep.subr.bf16.mxu0 0
      %706 = vmatpush2.bf16.msra.mxu0 0
      %707 = vmatprep.subr.bf16.mxu0 0
      %708 = vmatpush2.bf16.msra.mxu0 0
      %709 = vmatprep.subr.bf16.mxu0 0
      %710 = vmatpush2.bf16.msra.mxu0 0
      %711 = vmatprep.subr.bf16.mxu0 0
      %712 = vmatpush2.bf16.msra.mxu0 0
      %713 = vmatprep.mubr.bf16.mxu0 0
      %714 = vmatmul.mubr.bf16.gmra.mxu0 %v658
      %v715 = vpop.f32.mrf.mxu0
      %v716 = vadd.f32 %v643, %v715
      %v717 = vpop.f32.mrf.mxu0
      %v718 = vpop.f32.mrf.mxu0
      %v719 = vadd.f32 %v643, %v718
      %v720 = vpop.f32.mrf.mxu0
      %721 = vmatprep.mubr.bf16.mxu0 0
      %722 = vmatmul.mubr.bf16.gmra.mxu0 %v661
      %v723 = vpop.f32.mrf.mxu0
      %v724 = vadd.f32 %v643, %v723
      %v725 = vpop.f32.mrf.mxu0
      %v726 = vpop.f32.mrf.mxu0
      %v727 = vadd.f32 %v643, %v726
      %v728 = vpop.f32.mrf.mxu0
      %729 = vmatprep.mubr.bf16.mxu0 0
      %730 = vmatmul.mubr.bf16.gmra.mxu0 %v664
      %v731 = vpop.f32.mrf.mxu0
      %v732 = vadd.f32 %v643, %v731
      %v733 = vpop.f32.mrf.mxu0
      %v734 = vpop.f32.mrf.mxu0
      %v735 = vadd.f32 %v643, %v734
      %v736 = vpop.f32.mrf.mxu0
      %737 = vmatprep.mubr.bf16.mxu0 0
      %738 = vmatmul.mubr.bf16.gmra.mxu0 %v667
      %v739 = vpop.f32.mrf.mxu0
      %v740 = vadd.f32 %v643, %v739
      %v741 = vpop.f32.mrf.mxu0
      %v742 = vpop.f32.mrf.mxu0
      %v743 = vadd.f32 %v643, %v742
      %v744 = vpop.f32.mrf.mxu0
      %745 = vmatprep.mubr.bf16.mxu0 0
      %746 = vmatmul.mubr.bf16.gmra.mxu0 %v670
      %v747 = vpop.f32.mrf.mxu0
      %v748 = vadd.f32 %v643, %v747
      %v749 = vpop.f32.mrf.mxu0
      %v750 = vpop.f32.mrf.mxu0
      %v751 = vadd.f32 %v643, %v750
      %v752 = vpop.f32.mrf.mxu0
      %753 = vmatprep.mubr.bf16.mxu0 0
      %754 = vmatmul.mubr.bf16.gmra.mxu0 %v673
      %v755 = vpop.f32.mrf.mxu0
      %v756 = vadd.f32 %v643, %v755
      %v757 = vpop.f32.mrf.mxu0
      %v758 = vpop.f32.mrf.mxu0
      %v759 = vadd.f32 %v643, %v758
      %v760 = vpop.f32.mrf.mxu0
      %761 = vmatprep.mubr.bf16.mxu0 0
      %762 = vmatmul.mubr.bf16.gmra.mxu0 %v676
      %v763 = vpop.f32.mrf.mxu0
      %v764 = vadd.f32 %v643, %v763
      %v765 = vpop.f32.mrf.mxu0
      %v766 = vpop.f32.mrf.mxu0
      %v767 = vadd.f32 %v643, %v766
      %v768 = vpop.f32.mrf.mxu0
      %769 = vmatprep.mubr.bf16.mxu0 0
      %770 = vmatmul.mubr.bf16.gmra.mxu0 %v679
      %v771 = vpop.f32.mrf.mxu0
      %v772 = vadd.f32 %v643, %v771
      %v773 = vpop.f32.mrf.mxu0
      %v774 = vpop.f32.mrf.mxu0
      %v775 = vadd.f32 %v643, %v774
      %v776 = vpop.f32.mrf.mxu0
      %777 = vdwg.mxu0
      %794 = vrot.lane.b32.xlu0 %v716, 120
      %v795 = vpop.permute.xlu0 %794
      %796 = vrot.lane.b32.xlu0 %v719, 120
      %v797 = vpop.permute.xlu0 %796
      %798 = vrot.lane.b32.xlu0 %v724, 120
      %v799 = vpop.permute.xlu0 %798
      %800 = vrot.lane.b32.xlu0 %v727, 120
      %v801 = vpop.permute.xlu0 %800
      %802 = vrot.lane.b32.xlu0 %v732, 120
      %v803 = vpop.permute.xlu0 %802
      %804 = vrot.lane.b32.xlu0 %v735, 120
      %v805 = vpop.permute.xlu0 %804
      %806 = vrot.lane.b32.xlu0 %v740, 120
      %v807 = vpop.permute.xlu0 %806
      %808 = vrot.lane.b32.xlu0 %v743, 120
      %v809 = vpop.permute.xlu0 %808
      %810 = vrot.lane.b32.xlu0 %v748, 120
      %v811 = vpop.permute.xlu0 %810
      %812 = vrot.lane.b32.xlu0 %v751, 120
      %v813 = vpop.permute.xlu0 %812
      %814 = vrot.lane.b32.xlu0 %v756, 120
      %v815 = vpop.permute.xlu0 %814
      %816 = vrot.lane.b32.xlu0 %v759, 120
      %v817 = vpop.permute.xlu0 %816
      %818 = vrot.lane.b32.xlu0 %v764, 120
      %v819 = vpop.permute.xlu0 %818
      %820 = vrot.lane.b32.xlu0 %v767, 120
      %v821 = vpop.permute.xlu0 %820
      %822 = vrot.lane.b32.xlu0 %v772, 120
      %v823 = vpop.permute.xlu0 %822
      %824 = vrot.lane.b32.xlu0 %v775, 120
      %v825 = vpop.permute.xlu0 %824
      %v842 = vmax.f32 %v716, %v795
      %v843 = vmax.f32 %v719, %v797
      %v844 = vmax.f32 %v724, %v799
      %v845 = vmax.f32 %v727, %v801
      %v846 = vmax.f32 %v732, %v803
      %v847 = vmax.f32 %v735, %v805
      %v848 = vmax.f32 %v740, %v807
      %v849 = vmax.f32 %v743, %v809
      %v850 = vmax.f32 %v748, %v811
      %v851 = vmax.f32 %v751, %v813
      %v852 = vmax.f32 %v756, %v815
      %v853 = vmax.f32 %v759, %v817
      %v854 = vmax.f32 %v764, %v819
      %v855 = vmax.f32 %v767, %v821
      %v856 = vmax.f32 %v772, %v823
      %v857 = vmax.f32 %v775, %v825
      %v858 = vsub.f32 %v716, %v842
      %v859 = vsub.f32 %v719, %v843
      %v860 = vsub.f32 %v724, %v844
      %v861 = vsub.f32 %v727, %v845
      %v862 = vsub.f32 %v732, %v846
      %v863 = vsub.f32 %v735, %v847
      %v864 = vsub.f32 %v740, %v848
      %v865 = vsub.f32 %v743, %v849
      %v866 = vsub.f32 %v748, %v850
      %v867 = vsub.f32 %v751, %v851
      %v868 = vsub.f32 %v756, %v852
      %v869 = vsub.f32 %v759, %v853
      %v870 = vsub.f32 %v764, %v854
      %v871 = vsub.f32 %v767, %v855
      %v872 = vsub.f32 %v772, %v856
      %v873 = vsub.f32 %v775, %v857
      %v874 = vmul.f32 %v858, 1.442695
      %v875 = vpow.pop %v874
      %v876 = vmul.f32 %v859, 1.442695
      %v877 = vpow.pop %v876
      %v878 = vmul.f32 %v860, 1.442695
      %v879 = vpow.pop %v878
      %v880 = vmul.f32 %v861, 1.442695
      %v881 = vpow.pop %v880
      %v882 = vmul.f32 %v862, 1.442695
      %v883 = vpow.pop %v882
      %v884 = vmul.f32 %v863, 1.442695
      %v885 = vpow.pop %v884
      %v886 = vmul.f32 %v864, 1.442695
      %v887 = vpow.pop %v886
      %v888 = vmul.f32 %v865, 1.442695
      %v889 = vpow.pop %v888
      %v890 = vmul.f32 %v866, 1.442695
      %v891 = vpow.pop %v890
      %v892 = vmul.f32 %v867, 1.442695
      %v893 = vpow.pop %v892
      %v894 = vmul.f32 %v868, 1.442695
      %v895 = vpow.pop %v894
      %v896 = vmul.f32 %v869, 1.442695
      %v897 = vpow.pop %v896
      %v898 = vmul.f32 %v870, 1.442695
      %v899 = vpow.pop %v898
      %v900 = vmul.f32 %v871, 1.442695
      %v901 = vpow.pop %v900
      %v902 = vmul.f32 %v872, 1.442695
      %v903 = vpow.pop %v902
      %v904 = vmul.f32 %v873, 1.442695
      %v905 = vpow.pop %v904
      %922 = vrot.lane.b32.xlu0 %v842, 8
      %v923 = vpop.permute.xlu0 %922
      %924 = vrot.lane.b32.xlu0 %v843, 8
      %v925 = vpop.permute.xlu0 %924
      %926 = vrot.lane.b32.xlu0 %v844, 8
      %v927 = vpop.permute.xlu0 %926
      %928 = vrot.lane.b32.xlu0 %v845, 8
      %v929 = vpop.permute.xlu0 %928
      %930 = vrot.lane.b32.xlu0 %v846, 8
      %v931 = vpop.permute.xlu0 %930
      %932 = vrot.lane.b32.xlu0 %v847, 8
      %v933 = vpop.permute.xlu0 %932
      %934 = vrot.lane.b32.xlu0 %v848, 8
      %v935 = vpop.permute.xlu0 %934
      %936 = vrot.lane.b32.xlu0 %v849, 8
      %v937 = vpop.permute.xlu0 %936
      %938 = vrot.lane.b32.xlu0 %v850, 8
      %v939 = vpop.permute.xlu0 %938
      %940 = vrot.lane.b32.xlu0 %v851, 8
      %v941 = vpop.permute.xlu0 %940
      %942 = vrot.lane.b32.xlu0 %v852, 8
      %v943 = vpop.permute.xlu0 %942
      %944 = vrot.lane.b32.xlu0 %v853, 8
      %v945 = vpop.permute.xlu0 %944
      %946 = vrot.lane.b32.xlu0 %v854, 8
      %v947 = vpop.permute.xlu0 %946
      %948 = vrot.lane.b32.xlu0 %v855, 8
      %v949 = vpop.permute.xlu0 %948
      %950 = vrot.lane.b32.xlu0 %v856, 8
      %v951 = vpop.permute.xlu0 %950
      %952 = vrot.lane.b32.xlu0 %v857, 8
      %v953 = vpop.permute.xlu0 %952
      %v970 = vsub.f32 %v716, %v923
      %v971 = vsub.f32 %v719, %v925
      %v972 = vsub.f32 %v724, %v927
      %v973 = vsub.f32 %v727, %v929
      %v974 = vsub.f32 %v732, %v931
      %v975 = vsub.f32 %v735, %v933
      %v976 = vsub.f32 %v740, %v935
      %v977 = vsub.f32 %v743, %v937
      %v978 = vsub.f32 %v748, %v939
      %v979 = vsub.f32 %v751, %v941
      %v980 = vsub.f32 %v756, %v943
      %v981 = vsub.f32 %v759, %v945
      %v982 = vsub.f32 %v764, %v947
      %v983 = vsub.f32 %v767, %v949
      %v984 = vsub.f32 %v772, %v951
      %v985 = vsub.f32 %v775, %v953
      %v986 = vmul.f32 %v970, 1.442695
      %v987 = vpow.pop %v986
      %v988 = vmul.f32 %v971, 1.442695
      %v989 = vpow.pop %v988
      %v990 = vmul.f32 %v972, 1.442695
      %v991 = vpow.pop %v990
      %v992 = vmul.f32 %v973, 1.442695
      %v993 = vpow.pop %v992
      %v994 = vmul.f32 %v974, 1.442695
      %v995 = vpow.pop %v994
      %v996 = vmul.f32 %v975, 1.442695
      %v997 = vpow.pop %v996
      %v998 = vmul.f32 %v976, 1.442695
      %v999 = vpow.pop %v998
      %v1000 = vmul.f32 %v977, 1.442695
      %v1001 = vpow.pop %v1000
      %v1002 = vmul.f32 %v978, 1.442695
      %v1003 = vpow.pop %v1002
      %v1004 = vmul.f32 %v979, 1.442695
      %v1005 = vpow.pop %v1004
      %v1006 = vmul.f32 %v980, 1.442695
      %v1007 = vpow.pop %v1006
      %v1008 = vmul.f32 %v981, 1.442695
      %v1009 = vpow.pop %v1008
      %v1010 = vmul.f32 %v982, 1.442695
      %v1011 = vpow.pop %v1010
      %v1012 = vmul.f32 %v983, 1.442695
      %v1013 = vpow.pop %v1012
      %v1014 = vmul.f32 %v984, 1.442695
      %v1015 = vpow.pop %v1014
      %v1016 = vmul.f32 %v985, 1.442695
      %v1017 = vpow.pop %v1016
      %1034 = vrot.lane.b32.xlu0 %v987, 120
      %v1035 = vpop.permute.xlu0 %1034
      %1036 = vrot.lane.b32.xlu0 %v989, 120
      %v1037 = vpop.permute.xlu0 %1036
      %1038 = vrot.lane.b32.xlu0 %v991, 120
      %v1039 = vpop.permute.xlu0 %1038
      %1040 = vrot.lane.b32.xlu0 %v993, 120
      %v1041 = vpop.permute.xlu0 %1040
      %1042 = vrot.lane.b32.xlu0 %v995, 120
      %v1043 = vpop.permute.xlu0 %1042
      %1044 = vrot.lane.b32.xlu0 %v997, 120
      %v1045 = vpop.permute.xlu0 %1044
      %1046 = vrot.lane.b32.xlu0 %v999, 120
      %v1047 = vpop.permute.xlu0 %1046
      %1048 = vrot.lane.b32.xlu0 %v1001, 120
      %v1049 = vpop.permute.xlu0 %1048
      %1050 = vrot.lane.b32.xlu0 %v1003, 120
      %v1051 = vpop.permute.xlu0 %1050
      %1052 = vrot.lane.b32.xlu0 %v1005, 120
      %v1053 = vpop.permute.xlu0 %1052
      %1054 = vrot.lane.b32.xlu0 %v1007, 120
      %v1055 = vpop.permute.xlu0 %1054
      %1056 = vrot.lane.b32.xlu0 %v1009, 120
      %v1057 = vpop.permute.xlu0 %1056
      %1058 = vrot.lane.b32.xlu0 %v1011, 120
      %v1059 = vpop.permute.xlu0 %1058
      %1060 = vrot.lane.b32.xlu0 %v1013, 120
      %v1061 = vpop.permute.xlu0 %1060
      %1062 = vrot.lane.b32.xlu0 %v1015, 120
      %v1063 = vpop.permute.xlu0 %1062
      %1064 = vrot.lane.b32.xlu0 %v1017, 120
      %v1065 = vpop.permute.xlu0 %1064
      %v1082 = vadd.f32 %v875, %v1035
      %v1083 = vadd.f32 %v877, %v1037
      %v1084 = vadd.f32 %v879, %v1039
      %v1085 = vadd.f32 %v881, %v1041
      %v1086 = vadd.f32 %v883, %v1043
      %v1087 = vadd.f32 %v885, %v1045
      %v1088 = vadd.f32 %v887, %v1047
      %v1089 = vadd.f32 %v889, %v1049
      %v1090 = vadd.f32 %v891, %v1051
      %v1091 = vadd.f32 %v893, %v1053
      %v1092 = vadd.f32 %v895, %v1055
      %v1093 = vadd.f32 %v897, %v1057
      %v1094 = vadd.f32 %v899, %v1059
      %v1095 = vadd.f32 %v901, %v1061
      %v1096 = vadd.f32 %v903, %v1063
      %v1097 = vadd.f32 %v905, %v1065
      %v1098 = vrcp.pop %v1082
      %v1099 = vrcp.pop %v1083
      %v1100 = vrcp.pop %v1084
      %v1101 = vrcp.pop %v1085
      %v1102 = vrcp.pop %v1086
      %v1103 = vrcp.pop %v1087
      %v1104 = vrcp.pop %v1088
      %v1105 = vrcp.pop %v1089
      %v1106 = vrcp.pop %v1090
      %v1107 = vrcp.pop %v1091
      %v1108 = vrcp.pop %v1092
      %v1109 = vrcp.pop %v1093
      %v1110 = vrcp.pop %v1094
      %v1111 = vrcp.pop %v1095
      %v1112 = vrcp.pop %v1096
      %v1113 = vrcp.pop %v1097
      %v1114 = vmul.f32 %v1082, %v1098
      %v1115 = vmul.f32 %v1083, %v1099
      %v1116 = vmul.f32 %v1084, %v1100
      %v1117 = vmul.f32 %v1085, %v1101
      %v1118 = vmul.f32 %v1086, %v1102
      %v1119 = vmul.f32 %v1087, %v1103
      %v1120 = vmul.f32 %v1088, %v1104
      %v1121 = vmul.f32 %v1089, %v1105
      %v1122 = vmul.f32 %v1090, %v1106
      %v1123 = vmul.f32 %v1091, %v1107
      %v1124 = vmul.f32 %v1092, %v1108
      %v1125 = vmul.f32 %v1093, %v1109
      %v1126 = vmul.f32 %v1094, %v1110
      %v1127 = vmul.f32 %v1095, %v1111
      %v1128 = vmul.f32 %v1096, %v1112
      %v1129 = vmul.f32 %v1097, %v1113
      %v1130 = vsub.f32 2.0, %v1114
      %v1131 = vsub.f32 2.0, %v1115
      %v1132 = vsub.f32 2.0, %v1116
      %v1133 = vsub.f32 2.0, %v1117
      %v1134 = vsub.f32 2.0, %v1118
      %v1135 = vsub.f32 2.0, %v1119
      %v1136 = vsub.f32 2.0, %v1120
      %v1137 = vsub.f32 2.0, %v1121
      %v1138 = vsub.f32 2.0, %v1122
      %v1139 = vsub.f32 2.0, %v1123
      %v1140 = vsub.f32 2.0, %v1124
      %v1141 = vsub.f32 2.0, %v1125
      %v1142 = vsub.f32 2.0, %v1126
      %v1143 = vsub.f32 2.0, %v1127
      %v1144 = vsub.f32 2.0, %v1128
      %v1145 = vsub.f32 2.0, %v1129
      %v1146 = vmul.f32 %v1098, %v1130
      %v1147 = vmul.f32 %v1099, %v1131
      %v1148 = vmul.f32 %v1100, %v1132
      %v1149 = vmul.f32 %v1101, %v1133
      %v1150 = vmul.f32 %v1102, %v1134
      %v1151 = vmul.f32 %v1103, %v1135
      %v1152 = vmul.f32 %v1104, %v1136
      %v1153 = vmul.f32 %v1105, %v1137
      %v1154 = vmul.f32 %v1106, %v1138
      %v1155 = vmul.f32 %v1107, %v1139
      %v1156 = vmul.f32 %v1108, %v1140
      %v1157 = vmul.f32 %v1109, %v1141
      %v1158 = vmul.f32 %v1110, %v1142
      %v1159 = vmul.f32 %v1111, %v1143
      %v1160 = vmul.f32 %v1112, %v1144
      %v1161 = vmul.f32 %v1113, %v1145
      %v1162 = vmul.f32 %v875, %v1146
      %v1163 = vmul.f32 %v877, %v1147
      %v1164 = vmul.f32 %v879, %v1148
      %v1165 = vmul.f32 %v881, %v1149
      %v1166 = vmul.f32 %v883, %v1150
      %v1167 = vmul.f32 %v885, %v1151
      %v1168 = vmul.f32 %v887, %v1152
      %v1169 = vmul.f32 %v889, %v1153
      %v1170 = vmul.f32 %v891, %v1154
      %v1171 = vmul.f32 %v893, %v1155
      %v1172 = vmul.f32 %v895, %v1156
      %v1173 = vmul.f32 %v897, %v1157
      %v1174 = vmul.f32 %v899, %v1158
      %v1175 = vmul.f32 %v901, %v1159
      %v1176 = vmul.f32 %v903, %v1160
      %v1177 = vmul.f32 %v905, %v1161
      %1194 = vrot.lane.b32.xlu0 %v1146, 8
      %v1195 = vpop.permute.xlu0 %1194
      %1196 = vrot.lane.b32.xlu0 %v1147, 8
      %v1197 = vpop.permute.xlu0 %1196
      %1198 = vrot.lane.b32.xlu0 %v1148, 8
      %v1199 = vpop.permute.xlu0 %1198
      %1200 = vrot.lane.b32.xlu0 %v1149, 8
      %v1201 = vpop.permute.xlu0 %1200
      %1202 = vrot.lane.b32.xlu0 %v1150, 8
      %v1203 = vpop.permute.xlu0 %1202
      %1204 = vrot.lane.b32.xlu0 %v1151, 8
      %v1205 = vpop.permute.xlu0 %1204
      %1206 = vrot.lane.b32.xlu0 %v1152, 8
      %v1207 = vpop.permute.xlu0 %1206
      %1208 = vrot.lane.b32.xlu0 %v1153, 8
      %v1209 = vpop.permute.xlu0 %1208
      %1210 = vrot.lane.b32.xlu0 %v1154, 8
      %v1211 = vpop.permute.xlu0 %1210
      %1212 = vrot.lane.b32.xlu0 %v1155, 8
      %v1213 = vpop.permute.xlu0 %1212
      %1214 = vrot.lane.b32.xlu0 %v1156, 8
      %v1215 = vpop.permute.xlu0 %1214
      %1216 = vrot.lane.b32.xlu0 %v1157, 8
      %v1217 = vpop.permute.xlu0 %1216
      %1218 = vrot.lane.b32.xlu0 %v1158, 8
      %v1219 = vpop.permute.xlu0 %1218
      %1220 = vrot.lane.b32.xlu0 %v1159, 8
      %v1221 = vpop.permute.xlu0 %1220
      %1222 = vrot.lane.b32.xlu0 %v1160, 8
      %v1223 = vpop.permute.xlu0 %1222
      %1224 = vrot.lane.b32.xlu0 %v1161, 8
      %v1225 = vpop.permute.xlu0 %1224
      %v1242 = vmul.f32 %v987, %v1195
      %v1243 = vmul.f32 %v989, %v1197
      %v1244 = vmul.f32 %v991, %v1199
      %v1245 = vmul.f32 %v993, %v1201
      %v1246 = vmul.f32 %v995, %v1203
      %v1247 = vmul.f32 %v997, %v1205
      %v1248 = vmul.f32 %v999, %v1207
      %v1249 = vmul.f32 %v1001, %v1209
      %v1250 = vmul.f32 %v1003, %v1211
      %v1251 = vmul.f32 %v1005, %v1213
      %v1252 = vmul.f32 %v1007, %v1215
      %v1253 = vmul.f32 %v1009, %v1217
      %v1254 = vmul.f32 %v1011, %v1219
      %v1255 = vmul.f32 %v1013, %v1221
      %v1256 = vmul.f32 %v1015, %v1223
      %v1257 = vmul.f32 %v1017, %v1225
      %v1258 = vsel %vm315, %v1162, %v1242
      %v1259 = vsel %vm315, %v1163, %v1243
      %v1260 = vsel %vm315, %v1164, %v1244
      %v1261 = vsel %vm315, %v1165, %v1245
      %v1262 = vsel %vm315, %v1166, %v1246
      %v1263 = vsel %vm315, %v1167, %v1247
      %v1264 = vsel %vm315, %v1168, %v1248
      %v1265 = vsel %vm315, %v1169, %v1249
      %v1266 = vsel %vm315, %v1170, %v1250
      %v1267 = vsel %vm315, %v1171, %v1251
      %v1268 = vsel %vm315, %v1172, %v1252
      %v1269 = vsel %vm315, %v1173, %v1253
      %v1270 = vsel %vm315, %v1174, %v1254
      %v1271 = vsel %vm315, %v1175, %v1255
      %v1272 = vsel %vm315, %v1176, %v1256
      %v1273 = vsel %vm315, %v1177, %v1257
      %vm1274 = vcmask 130048
      %v1275 = vsel %vm1274, %v1258, %v716
      %v1276 = vsel %vm1274, %v1259, %v719
      %v1277 = vsel %vm1274, %v1260, %v724
      %v1278 = vsel %vm1274, %v1261, %v727
      %v1279 = vsel %vm1274, %v1262, %v732
      %v1280 = vsel %vm1274, %v1263, %v735
      %v1281 = vsel %vm1274, %v1264, %v740
      %v1282 = vsel %vm1274, %v1265, %v743
      %v1283 = vsel %vm1274, %v1266, %v748
      %v1284 = vsel %vm1274, %v1267, %v751
      %v1285 = vsel %vm1274, %v1268, %v756
      %v1286 = vsel %vm1274, %v1269, %v759
      %v1287 = vsel %vm1274, %v1270, %v764
      %v1288 = vsel %vm1274, %v1271, %v767
      %v1289 = vsel %vm1274, %v1272, %v772
      %v1290 = vsel %vm1274, %v1273, %v775
      %vm1291 = vcmask 392192
      %1292 = vst.msk [vmem:[%s280] sm:$0xff] %vm1291, %v1275
      %1293 = vst.msk [vmem:[%s280 + $0x8] sm:$0xff] %vm1291, %v1276
      %1294 = vst.msk [vmem:[%s280 + $0x10] sm:$0xff] %vm1291, %v1277
      %1295 = vst.msk [vmem:[%s280 + $0x18] sm:$0xff] %vm1291, %v1278
      %1296 = vst.msk [vmem:[%s280 + $0x20] sm:$0xff] %vm1291, %v1279
      %1297 = vst.msk [vmem:[%s280 + $0x28] sm:$0xff] %vm1291, %v1280
      %1298 = vst.msk [vmem:[%s280 + $0x30] sm:$0xff] %vm1291, %v1281
      %1299 = vst.msk [vmem:[%s280 + $0x38] sm:$0xff] %vm1291, %v1282
      %1300 = vst.msk [vmem:[%s280 + $0x40] sm:$0xff] %vm1291, %v1283
      %1301 = vst.msk [vmem:[%s280 + $0x48] sm:$0xff] %vm1291, %v1284
      %1302 = vst.msk [vmem:[%s280 + $0x50] sm:$0xff] %vm1291, %v1285
      %1303 = vst.msk [vmem:[%s280 + $0x58] sm:$0xff] %vm1291, %v1286
      %1304 = vst.msk [vmem:[%s280 + $0x60] sm:$0xff] %vm1291, %v1287
      %1305 = vst.msk [vmem:[%s280 + $0x68] sm:$0xff] %vm1291, %v1288
      %1306 = vst.msk [vmem:[%s280 + $0x70] sm:$0xff] %vm1291, %v1289
      %1307 = vst.msk [vmem:[%s280 + $0x78] sm:$0xff] %vm1291, %v1290
      %s1308 = smul.u32 16, %s18
      %p1309 = scmp.lt.s32.totalorder %s1308, 31
      %s1310 = scalar_select %p1309, %s1308, 31
      %s1311 = smul.addr %s1310, 8
      %s1312 = scalar_lea.vmem %s7, %s1311
      // Predicated region
      $region49: #{tpu_custom_call.1} parent=47 // pred_check
        %p1313 = pneg %p188
      $region50: #{tpu_custom_call.1} parent=47 // pred_check_branch
        %1315 = sbr.rel (%p1313) target = $region52
      $region51: #{tpu_custom_call.1} parent=47 // pred_region
        %s1316 = smul.u32 16, %s18
      $region52: #{tpu_custom_call.1} parent=47 // pred_fallthru
        _
    $region48: #{tpu_custom_call.1} parent=5 // pred_fallthru
      _
    %p1317 = scmp.le.s32.totalorder 2, %s13
    // Predicated region
    $region53: #{tpu_custom_call.1} parent=5 // pred_check
      %p1318 = pneg %p1317
    $region54: #{tpu_custom_call.1} parent=5 // pred_check_branch
      %1320 = sbr.rel (%p1318) target = $region56
    $region55: #{tpu_custom_call.1} parent=5 // pred_region
      %s1321 = ssub.s32 %s13, 2
      // Predicated region
      $region57: #{tpu_custom_call.1} parent=55 // pred_check
        %p1322 = pneg %p194
      $region58: #{tpu_custom_call.1} parent=55 // pred_check_branch
        %1324 = sbr.rel (%p1322) target = $region60
      $region59: #{tpu_custom_call.1} parent=55 // pred_region
        %s1325 = smul.u32 16, %s19
        %p1326 = scmp.lt.s32.totalorder %s1325, 31
        %s1327 = scalar_select %p1326, %s1325, 31
        %s1328 = smul.addr %s1327, 8
        %s1329 = scalar_lea.vmem %s7, %s1328
      $region60: #{tpu_custom_call.1} parent=55 // pred_fallthru
        _
    $region56: #{tpu_custom_call.1} parent=5 // pred_fallthru
      _
  $region6: #{tpu_custom_call.1} parent=0 // loop_footer
    %s17 = sadd.s32 1, %s13
  $region7: #{tpu_custom_call.1} parent=0 // loop_footer_branch
    %12 = sbr.rel target = $region3
  $region8: #{tpu_custom_call.1} parent=0 // loop_exit
    _

</llo_original>
